<compile_context>
chip_gen: v7x
topology: tpu7x:2x2x1
jax: 0.10.0
libtpu: 0.0.40
codegen_flags: <defaults>
</compile_context>

<pallas_src>
import functools
import math

import jax
import jax.numpy as jnp
from jax.experimental import pallas as pl
from jax.experimental.pallas import tpu as pltpu

_EPS = 1e-07
_LOG_EPS = math.log(_EPS)                       # clamp bounds in log space
_LOG_ONE_MINUS_EPS = math.log(1.0 - _EPS)


def _tpu_params():
    """(vmem_capacity_bytes, tensorcores_per_chip) with safe fallbacks."""
    vmem_capacity = 64 * 1024 * 1024      # conservative default (v7x-class part)
    num_tc = 1
    try:
        info = pltpu.get_tpu_info()
        v = getattr(info, "vmem_capacity_bytes", None)
        if v:
            vmem_capacity = int(v)
        for attr in ("num_tensorcores", "tensorcore_count", "num_cores",
                     "cores_per_chip", "core_count"):
            v = getattr(info, attr, None)
            if v:
                num_tc = int(v)
                break
    except Exception:
        pass
    return vmem_capacity, num_tc


def _tile_budget(vmem_capacity_bytes):
    """(target bytes per input block, scoped vmem_limit_bytes) per chip generation."""
    if vmem_capacity_bytes <= 64 * 1024 * 1024:
        # 64 MiB parts (v7x): smaller blocks, headroom for f32 temporaries +
        # double-buffering; ~1-2 MiB blocks already amortize the ~0.35us/step cost.
        return 2 * 1024 * 1024, 40 * 1024 * 1024
    # 128 MiB parts (v5e/v6e): bigger blocks. The explicit limit also lifts v5e's
    # 16 MiB scoped-VMEM default so tiles actually double-buffer.
    return 8 * 1024 * 1024, 64 * 1024 * 1024


def _auto_tile_rows(batch, feat, in_itemsize, sublane,
                    target_block_bytes, vmem_limit_bytes):
    """Rows per tile from the real per-tile footprint, not just the input blocks."""
    # Per-row bytes:
    #   inputs:        2 arrays x 2 pipeline buffers x feat x itemsize
    #   temporaries:   ~6 full-tile f32 intermediates inside the body
    #   weights:       (rows, 1) f32 lane-pads to (rows, 128) = 512 B, x2 buffers
    per_row = 2 * 2 * feat * in_itemsize + 6 * feat * 4 + 2 * 512
    rows_budget = int(vmem_limit_bytes * 0.75) // max(1, per_row)
    rows_block = target_block_bytes // max(1, feat * in_itemsize)
    rows_cap = max(sublane, min(rows_budget, rows_block, 4096))
    if batch <= rows_cap:
        return batch                 # single tile: block == full array (always legal)
    return max(sublane, (rows_cap // sublane) * sublane)


def _wbce_kernel(yp_ref, yt_ref, w_ref, out_ref, acc_ref, *,
                 from_logits, binary_targets, needs_mask,
                 total_rows, tile_rows, tiles_per_part):
    p = pl.program_id(0)   # partition axis ("parallel": splits across TCs on dual-TC chips)
    i = pl.program_id(1)   # batch-tile axis ("arbitrary": running reduction)

    @pl.when(i == 0)
    def _init():
        acc_ref[0, 0] = jnp.float32(0.0)

    # Inputs stay in their native dtype (e.g. bf16) in HBM; cast in VMEM.
    yp = yp_ref[...].astype(jnp.float32)      # (TB, C)
    yt = yt_ref[...].astype(jnp.float32)      # (TB, C)
    w = w_ref[...]                            # (TB, 1) f32, zero-padded rows

    if needs_mask:
        # Ragged last tile: mask rows past the true batch (block reads there are
        # undefined and could carry NaN bit patterns). (TB,1) iota, broadcast in where.
        tile = p * tiles_per_part + i
        row = tile * tile_rows + jax.lax.broadcasted_iota(jnp.int32, (tile_rows, 1), 0)
        valid = row < total_rows
        yp = jnp.where(valid, yp, 0.5)
        yt = jnp.where(valid, yt, 0.0)

    if from_logits:
        # Log-space BCE reusing e = exp(x-m) and s = sum(e) for both log p and
        # log(1-p): 2 transcendentals/element (exp + log) instead of 3.
        # Clamping in log space is equivalent to clamping probabilities.
        m = jnp.max(yp, axis=-1, keepdims=True)
        e = jnp.exp(yp - m)
        s = jnp.sum(e, axis=-1, keepdims=True)
        log_s = jnp.log(s)
        logp = jnp.clip(yp - m - log_s, _LOG_EPS, _LOG_ONE_MINUS_EPS)
        log1mp = jnp.clip(jnp.log(jnp.maximum(s - e, 0.0)) - log_s,
                          _LOG_EPS, _LOG_ONE_MINUS_EPS)
        pos = log1mp + yt * (logp - log1mp)           # y*logp + (1-y)*log1mp
    else:
        pc = jnp.clip(yp, _EPS, 1.0 - _EPS)
        if binary_targets:
            # y_true in {0,1}: one log per element instead of two.
            q = jnp.where(yt > 0.5, pc, 1.0 - pc)
            pos = jnp.log(q)
        else:
            logp = jnp.log(pc)
            log1mp = jnp.log(1.0 - pc)
            pos = log1mp + yt * (logp - log1mp)

    # Reduce over C first (lane reduce), then apply the per-row weight; negation of
    # the BCE is folded into the scalar accumulate.
    row_sum = jnp.sum(pos, axis=-1, keepdims=True)    # (TB, 1)
    acc_ref[0, 0] -= jnp.sum(w * row_sum)

    @pl.when(i == pl.num_programs(1) - 1)
    def _flush():
        # Per-partition partial sum, replicated across its (8, 128) output block.
        out_ref[...] = jnp.full((8, 128), acc_ref[0, 0], dtype=jnp.float32)


def _wbce_reference(y_pred, y_true, batch_weights, from_logits):
    """Pure-JAX reference with the exact torch F.binary_cross_entropy semantics."""
    yp = y_pred.astype(jnp.float32)
    yt = y_true.astype(jnp.float32)
    if from_logits:
        yp = jax.nn.softmax(yp, axis=-1)
    yp = jnp.clip(yp, _EPS, 1.0 - _EPS)
    bce = -(yt * jnp.log(yp) + (1.0 - yt) * jnp.log(1.0 - yp))
    return jnp.mean(batch_weights.astype(jnp.float32)[:, None] * bce)


def weighted_variance_cross_entropy_loss(y_pred, y_true, batch_weights,
                                         from_logits=False, *,
                                         binary_targets=False,
                                         use_pallas=None, tile_rows=None,
                                         num_parts=None):
    """batch_weights: [B] float array (already looked up from the dict)."""
    B, C = y_pred.shape
    bw = jnp.asarray(batch_weights, dtype=jnp.float32).reshape(B)

    if use_pallas is None:
        # Tiny problems are per-call-overhead bound; narrow class dims (C < 128)
        # leave most of the 128 vector lanes idle and hit the per-grid-step
        # overhead regime -> let XLA's fused elementwise+reduce handle those.
        # TODO(synk): a 128-lane-dense host re-layout (folding 128//C rows per
        # lane row, with a matching per-lane-row weight) would make narrow-C
        # shapes kernel-efficient; not implemented here.
        use_pallas = (B * C) >= 16384 and C >= 128
    if not use_pallas:
        return _wbce_reference(y_pred, y_true, bw, from_logits)

    vmem_capacity, num_tc = _tpu_params()
    target_block_bytes, vmem_limit = _tile_budget(vmem_capacity)

    in_itemsize = max(jnp.dtype(y_pred.dtype).itemsize,
                      jnp.dtype(y_true.dtype).itemsize)
    sublane = max(8, 32 // max(1, in_itemsize))       # 8 f32 / 16 bf16 / 32 int8
    if tile_rows is None:
        tile_rows = _auto_tile_rows(B, C, in_itemsize, sublane,
                                    target_block_bytes, vmem_limit)

    total_tiles = pl.cdiv(B, tile_rows)
    if num_parts is None:
        # 2-way split only where there is a second TensorCore to feed it; on
        # single-TC chips a dead partition axis only adds per-tile + flush cost.
        num_parts = 2 if num_tc >= 2 else 1
    num_parts = max(1, min(int(num_parts), total_tiles))
    tiles_per_part = pl.cdiv(total_tiles, num_parts)  # grid may be padded (odd tiles)
    padded_grid = num_parts * tiles_per_part != total_tiles

    # Per-row weights, zero-padded to the (possibly padded) grid extent so padded
    # rows / padded tiles contribute exactly zero.
    b_pad = num_parts * tiles_per_part * tile_rows
    w = jnp.zeros((b_pad, 1), jnp.float32).at[:B, 0].set(bw)

    last_tile = total_tiles - 1
    needs_mask = (B % tile_rows) != 0

    def w_map(p, i):
        return (p * tiles_per_part + i, 0)

    if padded_grid:
        # Padded tiles re-read the last real tile (clamped index) and multiply by
        # the zero weights above -> exact zero contribution, both cores stay busy.
        def data_map(p, i):
            return (jnp.minimum(p * tiles_per_part + i, last_tile), 0)
    else:
        data_map = w_map

    kernel = functools.partial(
        _wbce_kernel,
        from_logits=bool(from_logits),
        binary_targets=bool(binary_targets) and not from_logits,
        needs_mask=needs_mask,
        total_rows=B, tile_rows=tile_rows, tiles_per_part=tiles_per_part)

    partials = pl.pallas_call(
        kernel,
        out_shape=jax.ShapeDtypeStruct((num_parts * 8, 128), jnp.float32),
        grid_spec=pltpu.PrefetchScalarGridSpec(
            num_scalar_prefetch=0,
            grid=(num_parts, tiles_per_part),
            in_specs=[
                pl.BlockSpec((tile_rows, C), data_map),   # y_pred (native dtype)
                pl.BlockSpec((tile_rows, C), data_map),   # y_true (native dtype)
                pl.BlockSpec((tile_rows, 1), w_map),      # per-row weights (f32)
            ],
            out_specs=pl.BlockSpec((8, 128), lambda p, i: (p, 0)),
            scratch_shapes=[pltpu.SMEM((1, 1), jnp.float32)],
        ),
        compiler_params=pltpu.CompilerParams(
            dimension_semantics=("parallel", "arbitrary"),
            vmem_limit_bytes=vmem_limit),
    )(y_pred, y_true, w)

    # Row 0 of each partition's (8, 128) block carries its partial sum.
    return jnp.sum(partials[::8, 0]) * (1.0 / float(B * C))


def weights4batch(weights_dict, conditional_info):
    # Host glue: mirrors the torch `.item()`-based python-dict lookup (inherently host-side).
    return jnp.array([weights_dict[float(el)] for el in conditional_info],
                     dtype=jnp.float32)


if __name__ == "__main__":
    key = jax.random.PRNGKey(0)
    B, C = 8, 16
    k1, k2, k3, k4 = jax.random.split(key, 4)

    # --- case 1: probabilities, binary targets fast path ----------------------------
    y_pred = jax.random.uniform(k1, (B, C), dtype=jnp.float32, minval=0.01, maxval=0.99)
    y_true = (jax.random.uniform(k2, (B, C), dtype=jnp.float32) > 0.5).astype(jnp.float32)
    conditional_info = [round(0.25 * i, 4) for i in range(B)]
    weights_dict = {float(x): 0.5 + 0.5 * abs(math.sin(float(x))) for x in conditional_info}
    bw = weights4batch(weights_dict, conditional_info)

    loss = weighted_variance_cross_entropy_loss(y_pred, y_true, bw, from_logits=False,
                                                binary_targets=True, use_pallas=True)
    jax.block_until_ready(loss)
    ref = _wbce_reference(y_pred, y_true, bw, from_logits=False)
    assert jnp.allclose(loss, ref, rtol=1e-5, atol=1e-6), (loss, ref)

    # --- case 2: from_logits=True (log-space BCE, shared exp/sum) --------------------
    logits = jax.random.normal(k3, (B, C), dtype=jnp.float32)
    loss2 = weighted_variance_cross_entropy_loss(logits, y_true, bw,
                                                 from_logits=True, use_pallas=True)
    jax.block_until_ready(loss2)
    ref2 = _wbce_reference(logits, y_true, bw, from_logits=True)
    assert jnp.allclose(loss2, ref2, rtol=1e-4, atol=1e-6), (loss2, ref2)

    # --- case 3: 2 partitions x 2 tiles, ragged last tile (row mask path) ------------
    B3, C3 = 28, 16
    k5, k6, k7, k8 = jax.random.split(k4, 4)
    yp3 = jax.random.uniform(k5, (B3, C3), dtype=jnp.float32, minval=0.01, maxval=0.99)
    yt3 = (jax.random.uniform(k6, (B3, C3), dtype=jnp.float32) > 0.5).astype(jnp.float32)
    ci3 = [round(0.1 * i, 4) for i in range(B3)]
    wd3 = {float(x): 0.5 + 0.5 * abs(math.sin(float(x))) for x in ci3}
    bw3 = weights4batch(wd3, ci3)
    loss3 = weighted_variance_cross_entropy_loss(yp3, yt3, bw3, from_logits=False,
                                                 use_pallas=True, tile_rows=8, num_parts=2)
    jax.block_until_ready(loss3)
    ref3 = _wbce_reference(yp3, yt3, bw3, from_logits=False)
    assert jnp.allclose(loss3, ref3, rtol=1e-5, atol=1e-6), (loss3, ref3)

    # --- case 4: odd tile count with 2 partitions (padded grid, clamped index map) ---
    B4, C4 = 24, 16
    yp4 = jax.random.uniform(k7, (B4, C4), dtype=jnp.float32, minval=0.01, maxval=0.99)
    yt4 = (jax.random.uniform(k8, (B4, C4), dtype=jnp.float32) > 0.5).astype(jnp.float32)
    ci4 = [round(0.2 * i, 4) for i in range(B4)]
    wd4 = {float(x): 0.5 + 0.5 * abs(math.sin(float(x))) for x in ci4}
    bw4 = weights4batch(wd4, ci4)
    loss4 = weighted_variance_cross_entropy_loss(yp4, yt4, bw4, from_logits=False,
                                                 use_pallas=True, tile_rows=8, num_parts=2)
    jax.block_until_ready(loss4)
    ref4 = _wbce_reference(yp4, yt4, bw4, from_logits=False)
    assert jnp.allclose(loss4, ref4, rtol=1e-5, atol=1e-6), (loss4, ref4)

    # --- case 5: bf16 inputs, auto heuristic (C >= 128), native-dtype HBM traffic ----
    B5, C5 = 64, 256
    k9, k10 = jax.random.split(k5)
    yp5 = jax.random.uniform(k9, (B5, C5), dtype=jnp.float32,
                             minval=0.01, maxval=0.99).astype(jnp.bfloat16)
    yt5 = (jax.random.uniform(k10, (B5, C5), dtype=jnp.float32) > 0.5).astype(jnp.bfloat16)
    ci5 = [round(0.05 * i, 4) for i in range(B5)]
    wd5 = {float(x): 0.5 + 0.5 * abs(math.sin(float(x))) for x in ci5}
    bw5 = weights4batch(wd5, ci5)
    loss5 = weighted_variance_cross_entropy_loss(yp5, yt5, bw5, from_logits=False)
    jax.block_until_ready(loss5)
    ref5 = _wbce_reference(yp5, yt5, bw5, from_logits=False)
    assert jnp.allclose(loss5, ref5, rtol=1e-4, atol=1e-6), (loss5, ref5)

    print("KERNEL_OK")
</pallas_src>

<mosaic_0001>
module attributes {stable_mosaic.version = 11 : i64} {
  func.func @_wbce_kernel(%arg0: i32, %arg1: i32, %arg2: memref<8x16xf32, #tpu.memory_space<vmem>>, %arg3: memref<8x16xf32, #tpu.memory_space<vmem>>, %arg4: memref<8x1xf32, #tpu.memory_space<vmem>>, %arg5: memref<8x128xf32, #tpu.memory_space<vmem>>, %arg6: memref<1x1xf32, #tpu.memory_space<smem>>) attributes {dimension_semantics = [#tpu.dimension_semantics<parallel>, #tpu.dimension_semantics<arbitrary>], iteration_bounds = array<i64: 1, 1>, scalar_prefetch = 0 : i64, scratch_operands = 1 : i64, tpu.core_type = #tpu.core_type<tc>, window_params = [{transform_indices = @transform_0, window_bounds = array<i64: 8, 16>}, {transform_indices = @transform_1, window_bounds = array<i64: 8, 16>}, {transform_indices = @transform_2, window_bounds = array<i64: 8, 1>}, {transform_indices = @transform_3, window_bounds = array<i64: 8, 128>}]} {
    %c0_i32 = arith.constant 0 : i32
    %0 = arith.cmpi eq, %arg1, %c0_i32 : i32
    %1 = arith.extui %0 : i1 to i32
    %c0_i32_0 = arith.constant 0 : i32
    %2 = arith.cmpi ne, %1, %c0_i32_0 : i32
    scf.if %2 {
      %cst_17 = arith.constant 0.000000e+00 : f32
      %c0_18 = arith.constant 0 : index
      %c0_19 = arith.constant 0 : index
      %29 = memref.load %arg6[%c0_18, %c0_19] : memref<1x1xf32, #tpu.memory_space<smem>>
      memref.store %cst_17, %arg6[%c0_18, %c0_19] : memref<1x1xf32, #tpu.memory_space<smem>>
    } else {
    }
    %c0 = arith.constant 0 : index
    %c0_1 = arith.constant 0 : index
    %3 = vector.load %arg2[%c0, %c0_1] : memref<8x16xf32, #tpu.memory_space<vmem>>, vector<8x16xf32>
    %c0_2 = arith.constant 0 : index
    %c0_3 = arith.constant 0 : index
    %4 = vector.load %arg3[%c0_2, %c0_3] : memref<8x16xf32, #tpu.memory_space<vmem>>, vector<8x16xf32>
    %c0_4 = arith.constant 0 : index
    %c0_5 = arith.constant 0 : index
    %5 = vector.load %arg4[%c0_4, %c0_5] : memref<8x1xf32, #tpu.memory_space<vmem>>, vector<8x1xf32>
    %cst = arith.constant 1.000000e-07 : f32
    %cst_6 = arith.constant 0.99999988 : f32
    %6 = vector.broadcast %cst : f32 to vector<8x16xf32>
    %7 = arith.maximumf %6, %3 : vector<8x16xf32>
    %8 = vector.broadcast %cst_6 : f32 to vector<8x16xf32>
    %9 = arith.minimumf %8, %7 : vector<8x16xf32>
    %cst_7 = arith.constant 5.000000e-01 : f32
    %10 = vector.broadcast %cst_7 : f32 to vector<8x16xf32>
    %11 = arith.cmpf ogt, %4, %10 : vector<8x16xf32>
    %cst_8 = arith.constant 1.000000e+00 : f32
    %12 = vector.broadcast %cst_8 : f32 to vector<8x16xf32>
    %13 = arith.subf %12, %9 : vector<8x16xf32>
    %14 = arith.select %11, %9, %13 : vector<8x16xi1>, vector<8x16xf32>
    %15 = math.log %14 : vector<8x16xf32>
    %cst_9 = arith.constant dense<0.000000e+00> : vector<8xf32>
    %16 = vector.multi_reduction <add>, %15, %cst_9 [1] : vector<8x16xf32> to vector<8xf32>
    %17 = vector.shape_cast %16 : vector<8xf32> to vector<8x1xf32>
    %c0_10 = arith.constant 0 : index
    %c0_11 = arith.constant 0 : index
    %18 = memref.load %arg6[%c0_10, %c0_11] : memref<1x1xf32, #tpu.memory_space<smem>>
    %19 = arith.mulf %5, %17 : vector<8x1xf32>
    %20 = vector.shape_cast %19 : vector<8x1xf32> to vector<1x8x1xf32>
    %cst_12 = arith.constant dense<0.000000e+00> : vector<1xf32>
    %21 = vector.multi_reduction <add>, %20, %cst_12 [1, 2] : vector<1x8x1xf32> to vector<1xf32>
    %22 = vector.shape_cast %21 : vector<1xf32> to vector<1x1x1xf32>
    %23 = vector.extract %22[0, 0, 0] : f32 from vector<1x1x1xf32>
    %24 = arith.subf %18, %23 : f32
    %c0_13 = arith.constant 0 : index
    %c0_14 = arith.constant 0 : index
    %25 = memref.load %arg6[%c0_13, %c0_14] : memref<1x1xf32, #tpu.memory_space<smem>>
    memref.store %24, %arg6[%c0_13, %c0_14] : memref<1x1xf32, #tpu.memory_space<smem>>
    %c0_i32_15 = arith.constant 0 : i32
    %26 = arith.cmpi eq, %arg1, %c0_i32_15 : i32
    %27 = arith.extui %26 : i1 to i32
    %c0_i32_16 = arith.constant 0 : i32
    %28 = arith.cmpi ne, %27, %c0_i32_16 : i32
    scf.if %28 {
      %c0_17 = arith.constant 0 : index
      %c0_18 = arith.constant 0 : index
      %29 = memref.load %arg6[%c0_17, %c0_18] : memref<1x1xf32, #tpu.memory_space<smem>>
      %30 = vector.broadcast %29 : f32 to vector<8x128xf32>
      %c0_19 = arith.constant 0 : index
      %c0_20 = arith.constant 0 : index
      %31 = vector.load %arg5[%c0_19, %c0_20] : memref<8x128xf32, #tpu.memory_space<vmem>>, vector<8x128xf32>
      tpu.vector_store %arg5[%c0_19, %c0_20], %30 {strides = array<i32>} : memref<8x128xf32, #tpu.memory_space<vmem>>, vector<8x128xf32>,
    } else {
    }
    return
  }
  func.func @transform_0(%arg0: i32, %arg1: i32) -> (i32, i32) {
    %c1_i32 = arith.constant 1 : i32
    %0 = arith.muli %arg0, %c1_i32 : i32
    %1 = arith.addi %0, %arg1 : i32
    %c0_i32 = arith.constant 0 : i32
    %c0_i32_0 = arith.constant 0 : i32
    return %1, %c0_i32 : i32, i32
  }
  func.func @transform_1(%arg0: i32, %arg1: i32) -> (i32, i32) {
    %c1_i32 = arith.constant 1 : i32
    %0 = arith.muli %arg0, %c1_i32 : i32
    %1 = arith.addi %0, %arg1 : i32
    %c0_i32 = arith.constant 0 : i32
    %c0_i32_0 = arith.constant 0 : i32
    return %1, %c0_i32 : i32, i32
  }
  func.func @transform_2(%arg0: i32, %arg1: i32) -> (i32, i32) {
    %c1_i32 = arith.constant 1 : i32
    %0 = arith.muli %arg0, %c1_i32 : i32
    %1 = arith.addi %0, %arg1 : i32
    %c0_i32 = arith.constant 0 : i32
    %c0_i32_0 = arith.constant 0 : i32
    return %1, %c0_i32 : i32, i32
  }
  func.func @transform_3(%arg0: i32, %arg1: i32) -> (i32, i32) {
    %c0_i32 = arith.constant 0 : i32
    %c0_i32_0 = arith.constant 0 : i32
    return %arg0, %c0_i32 : i32, i32
  }
}

</mosaic_0001>

<llo_original>
// kernel: tpu_custom_call.1
$region0: #{tpu_custom_call.1}
  #allocation0 [shape = 'u32[]', space=smem, size = 0x4, offset = 0x4, fixed_abs, tag = 'smem constant byte address 0x4 - core index']
  #allocation1 [shape = 'u32[144,128]{1,0:T(1,128)}', space=vmem, size = 0x12000, scoped, tag = 'internal scratch']
  #allocation2 [shape = 'f32[1,1]{1,0:T(1,128)}', space=smem, size = 0x200, scoped, tag = 'scratch operand']
  %s0 = inlined_call_operand.vmem [shape: f32[8,16], index: 0, kind: input, shape index: {}]
  %s1 = inlined_call_operand.hbm [shape: f32[8,16], index: 1, kind: input, shape index: {}]
  %s2 = inlined_call_operand.vmem [shape: f32[8,1], index: 2, kind: input, shape index: {}]
  %s3 = inlined_call_operand.hbm [shape: f32[8,128], index: 3, kind: output, shape index: {}]
  %s4 = sld [smem:[#allocation0]]
  $region34: #{tpu_custom_call.1} parent=0
    _
  %s6 = ssub.s32 1, %s4
  %s7 = scalar_select 0, %s6, %s4
  $region1: #{tpu_custom_call.1} parent=0
    #allocation3 [shape = 'u8[4096]{0}', space=vmem, size = 0x1000, scoped, tag = 'input window, operand 1, single buffered']
    #allocation4 [shape = 's32[1]{0}', space=sflag, size = 0x4, scoped, tag = 'scoped memory for tpu_custom_call.1']
    #allocation5 [shape = 's32[1]{0}', space=sflag, size = 0x4, scoped, tag = 'scoped memory for tpu_custom_call.1']
    #allocation6 [shape = 'u8[4096]{0}', space=vmem, size = 0x1000, scoped, tag = 'output window, operand 0, single buffered']
    %8 = vsyncpa [#allocation4], 0
    %9 = vsyncpa [#allocation5], 0
    // Predicated region
    $region2: #{tpu_custom_call.1} parent=1 // pred_check
      _
    $region3: #{tpu_custom_call.1} parent=1 // pred_check_branch
      %11 = sbr.rel (0) target = $region5
    $region4: #{tpu_custom_call.1} parent=1 // pred_region
      %s12 = sadd.s32 0, 0
      %p13 = scmp.lt.s32.totalorder %s12, 0
      %s14 = scalar_select %p13, %s12, 0
      %s15 = smul.addr %s14, 8
      %s16 = scalar_lea.vmem %s0, %s15
      %s17 = sadd.s32 0, 0
    $region5: #{tpu_custom_call.1} parent=1 // pred_fallthru
      _
    // Predicated region
    $region6: #{tpu_custom_call.1} parent=1 // pred_check
      _
    $region7: #{tpu_custom_call.1} parent=1 // pred_check_branch
      %19 = sbr.rel (0) target = $region9
    $region8: #{tpu_custom_call.1} parent=1 // pred_region
      %s20 = sadd.s32 0, 0
      %s22 = ssub.s32 128, 128
      %23 = vsyncadd [#allocation4], %s22
      %s24 = smul.addr %s20, 128
      %s25 = scalar_lea.hbm %s1, %s24
      %s27 = sshll.u32 [#allocation3], 4
      %s28 = int_to_ptr.vmem [resolvable:$true] %s27
      %30 = dma.hbm_to_vmem [thread:$0]  %s25, 128, %s28, [#allocation4]
    $region9: #{tpu_custom_call.1} parent=1 // pred_fallthru
      _
    // Predicated region
    $region10: #{tpu_custom_call.1} parent=1 // pred_check
      _
    $region11: #{tpu_custom_call.1} parent=1 // pred_check_branch
      %32 = sbr.rel (0) target = $region13
    $region12: #{tpu_custom_call.1} parent=1 // pred_region
      %s33 = sadd.s32 0, 0
      %p34 = scmp.lt.s32.totalorder %s33, 0
      %s35 = scalar_select %p34, %s33, 0
      %s36 = smul.addr %s35, 8
      %s37 = scalar_lea.vmem %s2, %s36
      %s38 = sadd.s32 0, 0
    $region13: #{tpu_custom_call.1} parent=1 // pred_fallthru
      _
    // Predicated region
    $region14: #{tpu_custom_call.1} parent=1 // pred_check
      _
    $region15: #{tpu_custom_call.1} parent=1 // pred_check_branch
      %40 = sbr.rel (0) target = $region17
    $region16: #{tpu_custom_call.1} parent=1 // pred_region
      %41 = dma.done [#allocation4], 128
    $region17: #{tpu_custom_call.1} parent=1 // pred_fallthru
      _
    %s42 = sadd.s32 0, 0
    %p43 = scmp.lt.s32.totalorder %s42, 0
    %s44 = scalar_select %p43, %s42, 0
    %s45 = smul.addr %s44, 8
    %s46 = scalar_lea.vmem %s0, %s45
    %s47 = sadd.s32 0, 0
    %p48 = scmp.lt.s32.totalorder %s47, 0
    %s49 = scalar_select %p48, %s47, 0
    %s50 = smul.addr %s49, 8
    %s51 = scalar_lea.vmem %s2, %s50
    %s52 = sadd.s32 0, 0
    %p53 = scmp.lt.s32.totalorder %s52, 0
    %s54 = scalar_select %p53, %s52, 0
    %s55 = smul.addr %s54, 8
    %s56 = scalar_lea.vmem %s0, %s55
    %s57 = sadd.s32 0, 0
    %s58 = sadd.s32 0, 0
    %s59 = sadd.s32 0, 0
    %p60 = scmp.lt.s32.totalorder %s59, 0
    %s61 = scalar_select %p60, %s59, 0
    %s62 = smul.addr %s61, 8
    %s63 = scalar_lea.vmem %s2, %s62
    %s64 = sadd.s32 0, 0
    %p65 = scmp.eq.s32.totalorder 0, 0
    // Predicated region
    $region18: #{tpu_custom_call.1} parent=1 // pred_check
      %p66 = pneg %p65
    $region19: #{tpu_custom_call.1} parent=1 // pred_check_branch
      %68 = sbr.rel (%p66) target = $region21
    $region20: #{tpu_custom_call.1} parent=1 // pred_region
      %s69 = scalar_lea.smem [#allocation2], 0
      %70 = sst [smem:[%s69]] 0.0
    $region21: #{tpu_custom_call.1} parent=1 // pred_fallthru
      _
    %v71 = vld [vmem:[%s56] sm:$0xff]
    %v72 = vld [vmem:[#allocation3] sm:$0xff]
    %v73 = vld [vmem:[%s63] sm:$0xff]
    %v74 = vmax.f32 %v71, 1e-07
    %v75 = vmin.f32 %v74, 0.9999999
    %vm76 = vcmp.gt.f32.partialorder %v72, 0.5
    %v77 = vsub.f32 1.0, %v75
    %v78 = vsel %vm76, %v75, %v77
    %v79 = vlog2.pop %v78
    %v80 = vmul.f32 %v79, 0.6931472
    %vm81 = vcmask 130048
    %v82 = vsel %vm81, %v80, 0.0
    %83 = vadd.xlane.f32.xlu0 %v82
    %v84 = vpop.xlane.xlu0 %83
    %s85 = sld [smem:[#allocation2]]
    %v86 = vmul.f32 %v73, %v84
    %vm87 = vcmask 7168
    %v88 = vsel %vm87, %v86, 0.0
    %89 = vadd.xlane.f32.xlu0 %v88
    %v90 = vpop.xlane.xlu0 %89
    %v91 = vrot.slane %v90, 4
    %v92 = vadd.f32 %v90, %v91
    %v93 = vrot.slane %v92, 2
    %v94 = vadd.f32 %v92, %v93
    %v95 = vrot.slane %v94, 1
    %v96 = vadd.f32 %v94, %v95
    %s97 = vtos %v96
    %s98 = ssub.f32 %s85, %s97
    %s99 = scalar_lea.smem [#allocation2], 0
    %100 = sst [smem:[%s99]] %s98
    // Predicated region
    $region22: #{tpu_custom_call.1} parent=1 // pred_check
      %p101 = pneg %p65
    $region23: #{tpu_custom_call.1} parent=1 // pred_check_branch
      %103 = sbr.rel (%p101) target = $region25
    $region24: #{tpu_custom_call.1} parent=1 // pred_region
      %s104 = sld [smem:[#allocation2]]
      %v105 = vstv %s104
      %106 = vst [vmem:[#allocation6] sm:$0xff] %v105
    $region25: #{tpu_custom_call.1} parent=1 // pred_fallthru
      _
    // Predicated region
    $region26: #{tpu_custom_call.1} parent=1 // pred_check
      _
    $region27: #{tpu_custom_call.1} parent=1 // pred_check_branch
      %108 = sbr.rel (0) target = $region29
    $region28: #{tpu_custom_call.1} parent=1 // pred_region
      %s110 = ssub.s32 128, 128
      %111 = vsyncadd [#allocation5], %s110
      %s113 = sshll.u32 [#allocation6], 4
      %s114 = int_to_ptr.vmem [resolvable:$true] %s113
      %116 = dma.vmem_to_hbm [thread:$0]  %s114, 128, %s3, [#allocation5]
    $region29: #{tpu_custom_call.1} parent=1 // pred_fallthru
      _
    // Predicated region
    $region30: #{tpu_custom_call.1} parent=1 // pred_check
      _
    $region31: #{tpu_custom_call.1} parent=1 // pred_check_branch
      %118 = sbr.rel (0) target = $region33
    $region32: #{tpu_custom_call.1} parent=1 // pred_region
      %119 = dma.done [#allocation5], 128
    $region33: #{tpu_custom_call.1} parent=1 // pred_fallthru
      _
    %120 = vsyncpa [#allocation4], 1
    %121 = vsyncpa [#allocation5], 1

</llo_original>
